<compile_context>
chip_gen: v7x
topology: tpu7x:2x2x1
jax: 0.10.0
libtpu: 0.0.40
codegen_flags: <defaults>
</compile_context>

<pallas_src>
import functools

import jax
import jax.numpy as jnp
from jax.experimental import pallas as pl
from jax.experimental.pallas import tpu as pltpu


def _round_up(a, m):
    return ((a + m - 1) // m) * m


def _cdiv(a, b):
    return (a + b - 1) // b


# ---------------------------------------------------------------------------
# Kernels
# ---------------------------------------------------------------------------
def head_kernel_resident(x_ref, w_ref, o_ref):
    """Single K step: whole (padded) feature dim in one tile, weight resident.

    x_ref: (tm, Fp)  features tile          (compute dtype)
    w_ref: (Fp, Op)  full transposed weight (compute dtype)
    o_ref: (tm, Op)  f32 logits tile
    """
    x = jnp.maximum(x_ref[...], jnp.zeros((), x_ref.dtype))     # nn.ReLU
    o_ref[...] = jnp.dot(x, w_ref[...], preferred_element_type=jnp.float32)


def head_kernel_ktiled(x_ref, w_ref, o_ref):
    """(batch, K) grid step; accumulate directly into the resident f32 output.

    x_ref: (tm, tk)  features tile
    w_ref: (tk, Op)  transposed-weight K tile
    o_ref: (tm, Op)  f32 logits tile (same block across the K axis)
    """
    k = pl.program_id(1)
    x = jnp.maximum(x_ref[...], jnp.zeros((), x_ref.dtype))     # nn.ReLU per K tile
    partial = jnp.dot(x, w_ref[...], preferred_element_type=jnp.float32)

    @pl.when(k == 0)
    def _():
        o_ref[...] = partial

    @pl.when(k > 0)
    def _():
        o_ref[...] = o_ref[...] + partial


# ---------------------------------------------------------------------------
# Wrapper
# ---------------------------------------------------------------------------
@functools.partial(jax.jit, static_argnames=("compute_dtype", "tm", "tk"))
def head_forward(x_nchw, weight_oi, *, compute_dtype=jnp.bfloat16, tm=None, tk=None):
    """Full Head.forward.

    x_nchw:    (B, C, H, W) float32, NCHW like PyTorch.
    weight_oi: (out_features, in_features) float32 — PyTorch Linear layout.
    """
    # TODO(synk): the real Backbone is an arbitrary nn.Module passed to
    # __init__; a deterministic flatten stands in as the feature extractor.
    B = x_nchw.shape[0]
    feats = x_nchw.reshape(B, -1).astype(compute_dtype)           # (B, F)
    O_dim, F_dim = weight_oi.shape
    assert feats.shape[1] == F_dim

    # Pre-transpose the (constant) weight once in XLA: (O, F) -> (F, O).
    w_t = weight_oi.astype(compute_dtype).T                       # (F, O)

    itemsize = jnp.dtype(compute_dtype).itemsize
    sub = 16 if itemsize < 4 else 8                                # full vreg packing

    Op = _round_up(O_dim, 128)                                     # lane-dense output
    Fp = _round_up(F_dim, 128)

    # --- K tile: prefer a single resident K step; otherwise the largest
    #     <=2048 multiple of 128 that divides Fp (keeps the feature pad a
    #     no-op whenever F % 128 == 0). ---
    if tk is None:
        if Fp <= 2048:
            tk = Fp
        else:
            tk = 128
            for cand in range(2048, 0, -128):
                if Fp % cand == 0:
                    tk = cand
                    break
    Fp = _round_up(Fp, tk)
    num_k = Fp // tk

    # --- Batch tile: big (amortize per-step overhead) but aim for >=2 batch
    #     tiles when B allows it, so v7x's second TensorCore gets work. ---
    if tm is None:
        tm = max(sub, min(_round_up(_cdiv(B, 2), sub), 512))
    Bp = _round_up(B, tm)
    num_bm = Bp // tm

    feats_p = jnp.pad(feats, ((0, Bp - B), (0, Fp - F_dim)))       # no-op if aligned
    w_p = jnp.pad(w_t, ((0, Fp - F_dim), (0, Op - O_dim)))

    # Weight is re-streamed per batch tile only when K is tiled; with a single
    # constant-index K block Pallas fetches it exactly once.
    w_reads = num_bm if num_k > 1 else 1
    cost = pl.CostEstimate(
        flops=2 * Bp * Fp * Op,
        transcendentals=0,
        bytes_accessed=feats_p.size * itemsize
        + w_reads * w_p.size * itemsize
        + Bp * Op * 4,
    )

    # Worst case with caps (tm=512, tk=2048, bf16): ~12 MiB double-buffered,
    # so 32 MiB scoped VMEM is safe on v5e/v6e/v7x alike.
    compiler_params_1d = pltpu.CompilerParams(
        dimension_semantics=("parallel",),
        vmem_limit_bytes=32 * 1024 * 1024,
    )
    compiler_params_2d = pltpu.CompilerParams(
        dimension_semantics=("parallel", "arbitrary"),
        vmem_limit_bytes=32 * 1024 * 1024,
    )

    if num_k == 1:
        out_p = pl.pallas_call(
            head_kernel_resident,
            out_shape=jax.ShapeDtypeStruct((Bp, Op), jnp.float32),
            grid=(num_bm,),
            in_specs=[
                pl.BlockSpec((tm, Fp), lambda i: (i, 0)),          # features tile
                pl.BlockSpec((Fp, Op), lambda i: (0, 0)),          # resident weight
            ],
            out_specs=pl.BlockSpec((tm, Op), lambda i: (i, 0)),
            compiler_params=compiler_params_1d,
            cost_estimate=cost,
        )(feats_p, w_p)
    else:
        out_p = pl.pallas_call(
            head_kernel_ktiled,
            out_shape=jax.ShapeDtypeStruct((Bp, Op), jnp.float32),
            grid=(num_bm, num_k),
            in_specs=[
                pl.BlockSpec((tm, tk), lambda i, k: (i, k)),       # features tile
                pl.BlockSpec((tk, Op), lambda i, k: (k, 0)),       # weight K tile
            ],
            out_specs=pl.BlockSpec((tm, Op), lambda i, k: (i, 0)),
            compiler_params=compiler_params_2d,
            cost_estimate=cost,
        )(feats_p, w_p)

    out = out_p[:B, :O_dim]

    # torch.squeeze(out, 1): drop axis 1 only if its size is 1.
    if out.shape[1] == 1:
        out = out[:, 0]
    return out


# ---------------------------------------------------------------------------
# Self-test
# ---------------------------------------------------------------------------
if __name__ == "__main__":
    key = jax.random.PRNGKey(0)
    kx, kw = jax.random.split(key)

    # Small shapes consistent with the module: NCHW image-like input.
    B, C, H, W = 2, 4, 16, 16
    in_features = C * H * W          # 1024 (after flatten backbone)
    out_features = 2                 # Cats vs Dogs logits (CrossEntropyLoss)

    x = jax.random.normal(kx, (B, C, H, W), dtype=jnp.float32)
    # Deterministic Linear weight in PyTorch (out, in) layout, bias=False.
    weight = jax.random.normal(kw, (out_features, in_features), dtype=jnp.float32) * 0.02

    # Pure-JAX reference of the same semantics.
    ref = jnp.maximum(x.reshape(B, -1), 0.0) @ weight.T
    if ref.shape[1] == 1:
        ref = ref[:, 0]

    # Default path: bf16 inputs, f32 accumulation (HBM-bound -> ~2x fewer bytes).
    out_bf16 = jax.block_until_ready(head_forward(x, weight))
    assert out_bf16.shape == ref.shape
    assert jnp.allclose(out_bf16, ref, atol=2e-2, rtol=2e-2)

    # Full-f32 path for tight numerics.
    out_f32 = jax.block_until_ready(head_forward(x, weight, compute_dtype=jnp.float32))
    assert out_f32.shape == ref.shape
    assert jnp.allclose(out_f32, ref, atol=1e-4, rtol=1e-4)

    print("KERNEL_OK")
</pallas_src>

<mosaic_0001>
module attributes {stable_mosaic.version = 11 : i64} {
  func.func @head_kernel_resident(%arg0: i32, %arg1: memref<16x1024xbf16, #tpu.memory_space<vmem>>, %arg2: memref<1024x128xbf16, #tpu.memory_space<vmem>>, %arg3: memref<16x128xf32, #tpu.memory_space<vmem>>) attributes {dimension_semantics = [#tpu.dimension_semantics<parallel>], iteration_bounds = array<i64: 1>, scalar_prefetch = 0 : i64, scratch_operands = 0 : i64, tpu.core_type = #tpu.core_type<tc>, window_params = [{transform_indices = @transform_0, window_bounds = array<i64: 16, 1024>}, {pipeline_mode = #tpu.pipeline_mode<synchronous>, transform_indices = @transform_1, window_bounds = array<i64: 1024, 128>}, {transform_indices = @transform_2, window_bounds = array<i64: 16, 128>}]} {
    %c0 = arith.constant 0 : index
    %c0_0 = arith.constant 0 : index
    %0 = vector.load %arg1[%c0, %c0_0] : memref<16x1024xbf16, #tpu.memory_space<vmem>>, vector<16x1024xbf16>
    %cst = arith.constant 0.000000e+00 : bf16
    %1 = vector.broadcast %cst : bf16 to vector<16x1024xbf16>
    %2 = arith.maximumf %0, %1 : vector<16x1024xbf16>
    %c0_1 = arith.constant 0 : index
    %c0_2 = arith.constant 0 : index
    %3 = vector.load %arg2[%c0_1, %c0_2] : memref<1024x128xbf16, #tpu.memory_space<vmem>>, vector<1024x128xbf16>
    %cst_3 = arith.constant dense<0.000000e+00> : vector<16x128xf32>
    %4 = tpu.matmul %2, %3, %cst_3 {dimension_numbers = #tpu.dot_dimension_numbers<[1], [0], [0], [1], [0, 0, 1, 1], [], []>} : vector<16x1024xbf16>, vector<1024x128xbf16>, vector<16x128xf32> -> vector<16x128xf32>
    %c0_4 = arith.constant 0 : index
    %c0_5 = arith.constant 0 : index
    %5 = vector.load %arg3[%c0_4, %c0_5] : memref<16x128xf32, #tpu.memory_space<vmem>>, vector<16x128xf32>
    tpu.vector_store %arg3[%c0_4, %c0_5], %4 {strides = array<i32>} : memref<16x128xf32, #tpu.memory_space<vmem>>, vector<16x128xf32>,
    return
  }
  func.func @transform_0(%arg0: i32) -> (i32, i32) {
    %c0_i32 = arith.constant 0 : i32
    %c0_i32_0 = arith.constant 0 : i32
    return %arg0, %c0_i32 : i32, i32
  }
  func.func @transform_1(%arg0: i32) -> (i32, i32) {
    %c0_i32 = arith.constant 0 : i32
    %c0_i32_0 = arith.constant 0 : i32
    %c0_i32_1 = arith.constant 0 : i32
    return %c0_i32, %c0_i32_0 : i32, i32
  }
  func.func @transform_2(%arg0: i32) -> (i32, i32) {
    %c0_i32 = arith.constant 0 : i32
    %c0_i32_0 = arith.constant 0 : i32
    return %arg0, %c0_i32 : i32, i32
  }
}

</mosaic_0001>

<llo_original>
// kernel: head_forward.1
$region0: #{head_forward.1}
  #allocation0 [shape = 'u32[]', space=smem, size = 0x4, offset = 0x4, fixed_abs, tag = 'smem constant byte address 0x4 - core index']
  #allocation1 [shape = 'u32[144,128]{1,0:T(1,128)}', space=vmem, size = 0x12000, scoped, tag = 'internal scratch']
  %s0 = inlined_call_operand.vmem [shape: bf16[16,1024], index: 0, kind: input, shape index: {}]
  %s1 = inlined_call_operand.vmem [shape: bf16[1024,128], index: 1, kind: input, shape index: {}]
  %s2 = inlined_call_operand.vmem [shape: f32[16,128], index: 2, kind: output, shape index: {}]
  %s3 = sld [smem:[#allocation0]]
  $region18: #{head_forward.1} parent=0
    _
  %s5 = ssub.s32 1, %s3
  %s6 = scalar_select 0, %s5, %s3
  // Predicated region
  $region2: #{head_forward.1} parent=0 // pred_check
    _
  $region3: #{head_forward.1} parent=0 // pred_check_branch
    %8 = sbr.rel (0) target = $region5
  $region4: #{head_forward.1} parent=0 // pred_region
    _
  $region5: #{head_forward.1} parent=0 // pred_fallthru
    _
  // Predicated region
  $region6: #{head_forward.1} parent=0 // pred_check
    _
  $region7: #{head_forward.1} parent=0 // pred_check_branch
    %10 = sbr.rel (0) target = $region9
  $region8: #{head_forward.1} parent=0 // pred_region
    _
  $region9: #{head_forward.1} parent=0 // pred_fallthru
    _
  %v12 = vld [vmem:[%s0] sm:$0xff]
  %v13 = vld [vmem:[%s0 + $0x8] sm:$0xff]
  %v14 = vld [vmem:[%s0 + $0x10] sm:$0xff]
  %v15 = vld [vmem:[%s0 + $0x18] sm:$0xff]
  %v16 = vld [vmem:[%s0 + $0x20] sm:$0xff]
  %v17 = vld [vmem:[%s0 + $0x28] sm:$0xff]
  %v18 = vld [vmem:[%s0 + $0x30] sm:$0xff]
  %v19 = vld [vmem:[%s0 + $0x38] sm:$0xff]
  %v20 = vmax.bf16 %v12, 0
  %v21 = vmax.bf16 %v13, 0
  %v22 = vmax.bf16 %v14, 0
  %v23 = vmax.bf16 %v15, 0
  %v24 = vmax.bf16 %v16, 0
  %v25 = vmax.bf16 %v17, 0
  %v26 = vmax.bf16 %v18, 0
  %v27 = vmax.bf16 %v19, 0
  %v28 = vld [vmem:[%s1] sm:$0xf]
  %v29 = vld [vmem:[%s1 + $0x4] sm:$0xf]
  %v30 = vld [vmem:[%s1 + $0x8] sm:$0xf]
  %v31 = vld [vmem:[%s1 + $0xc] sm:$0xf]
  %v32 = vld [vmem:[%s1 + $0x10] sm:$0xf]
  %v33 = vld [vmem:[%s1 + $0x14] sm:$0xf]
  %v34 = vld [vmem:[%s1 + $0x18] sm:$0xf]
  %v35 = vld [vmem:[%s1 + $0x1c] sm:$0xf]
  %v36 = vld [vmem:[%s1 + $0x20] sm:$0xf]
  %v37 = vld [vmem:[%s1 + $0x24] sm:$0xf]
  %v38 = vld [vmem:[%s1 + $0x28] sm:$0xf]
  %v39 = vld [vmem:[%s1 + $0x2c] sm:$0xf]
  %v40 = vld [vmem:[%s1 + $0x30] sm:$0xf]
  %v41 = vld [vmem:[%s1 + $0x34] sm:$0xf]
  %v42 = vld [vmem:[%s1 + $0x38] sm:$0xf]
  %v43 = vld [vmem:[%s1 + $0x3c] sm:$0xf]
  %v44 = vld [vmem:[%s1 + $0x40] sm:$0xf]
  %v45 = vld [vmem:[%s1 + $0x44] sm:$0xf]
  %v46 = vld [vmem:[%s1 + $0x48] sm:$0xf]
  %v47 = vld [vmem:[%s1 + $0x4c] sm:$0xf]
  %v48 = vld [vmem:[%s1 + $0x50] sm:$0xf]
  %v49 = vld [vmem:[%s1 + $0x54] sm:$0xf]
  %v50 = vld [vmem:[%s1 + $0x58] sm:$0xf]
  %v51 = vld [vmem:[%s1 + $0x5c] sm:$0xf]
  %v52 = vld [vmem:[%s1 + $0x60] sm:$0xf]
  %v53 = vld [vmem:[%s1 + $0x64] sm:$0xf]
  %v54 = vld [vmem:[%s1 + $0x68] sm:$0xf]
  %v55 = vld [vmem:[%s1 + $0x6c] sm:$0xf]
  %v56 = vld [vmem:[%s1 + $0x70] sm:$0xf]
  %v57 = vld [vmem:[%s1 + $0x74] sm:$0xf]
  %v58 = vld [vmem:[%s1 + $0x78] sm:$0xf]
  %v59 = vld [vmem:[%s1 + $0x7c] sm:$0xf]
  %v60 = vld [vmem:[%s1 + $0x80] sm:$0xf]
  %v61 = vld [vmem:[%s1 + $0x84] sm:$0xf]
  %v62 = vld [vmem:[%s1 + $0x88] sm:$0xf]
  %v63 = vld [vmem:[%s1 + $0x8c] sm:$0xf]
  %v64 = vld [vmem:[%s1 + $0x90] sm:$0xf]
  %v65 = vld [vmem:[%s1 + $0x94] sm:$0xf]
  %v66 = vld [vmem:[%s1 + $0x98] sm:$0xf]
  %v67 = vld [vmem:[%s1 + $0x9c] sm:$0xf]
  %v68 = vld [vmem:[%s1 + $0xa0] sm:$0xf]
  %v69 = vld [vmem:[%s1 + $0xa4] sm:$0xf]
  %v70 = vld [vmem:[%s1 + $0xa8] sm:$0xf]
  %v71 = vld [vmem:[%s1 + $0xac] sm:$0xf]
  %v72 = vld [vmem:[%s1 + $0xb0] sm:$0xf]
  %v73 = vld [vmem:[%s1 + $0xb4] sm:$0xf]
  %v74 = vld [vmem:[%s1 + $0xb8] sm:$0xf]
  %v75 = vld [vmem:[%s1 + $0xbc] sm:$0xf]
  %v76 = vld [vmem:[%s1 + $0xc0] sm:$0xf]
  %v77 = vld [vmem:[%s1 + $0xc4] sm:$0xf]
  %v78 = vld [vmem:[%s1 + $0xc8] sm:$0xf]
  %v79 = vld [vmem:[%s1 + $0xcc] sm:$0xf]
  %v80 = vld [vmem:[%s1 + $0xd0] sm:$0xf]
  %v81 = vld [vmem:[%s1 + $0xd4] sm:$0xf]
  %v82 = vld [vmem:[%s1 + $0xd8] sm:$0xf]
  %v83 = vld [vmem:[%s1 + $0xdc] sm:$0xf]
  %v84 = vld [vmem:[%s1 + $0xe0] sm:$0xf]
  %v85 = vld [vmem:[%s1 + $0xe4] sm:$0xf]
  %v86 = vld [vmem:[%s1 + $0xe8] sm:$0xf]
  %v87 = vld [vmem:[%s1 + $0xec] sm:$0xf]
  %v88 = vld [vmem:[%s1 + $0xf0] sm:$0xf]
  %v89 = vld [vmem:[%s1 + $0xf4] sm:$0xf]
  %v90 = vld [vmem:[%s1 + $0xf8] sm:$0xf]
  %v91 = vld [vmem:[%s1 + $0xfc] sm:$0xf]
  %v92 = vld [vmem:[%s1 + $0x100] sm:$0xf]
  %v93 = vld [vmem:[%s1 + $0x104] sm:$0xf]
  %v94 = vld [vmem:[%s1 + $0x108] sm:$0xf]
  %v95 = vld [vmem:[%s1 + $0x10c] sm:$0xf]
  %v96 = vld [vmem:[%s1 + $0x110] sm:$0xf]
  %v97 = vld [vmem:[%s1 + $0x114] sm:$0xf]
  %v98 = vld [vmem:[%s1 + $0x118] sm:$0xf]
  %v99 = vld [vmem:[%s1 + $0x11c] sm:$0xf]
  %v100 = vld [vmem:[%s1 + $0x120] sm:$0xf]
  %v101 = vld [vmem:[%s1 + $0x124] sm:$0xf]
  %v102 = vld [vmem:[%s1 + $0x128] sm:$0xf]
  %v103 = vld [vmem:[%s1 + $0x12c] sm:$0xf]
  %v104 = vld [vmem:[%s1 + $0x130] sm:$0xf]
  %v105 = vld [vmem:[%s1 + $0x134] sm:$0xf]
  %v106 = vld [vmem:[%s1 + $0x138] sm:$0xf]
  %v107 = vld [vmem:[%s1 + $0x13c] sm:$0xf]
  %v108 = vld [vmem:[%s1 + $0x140] sm:$0xf]
  %v109 = vld [vmem:[%s1 + $0x144] sm:$0xf]
  %v110 = vld [vmem:[%s1 + $0x148] sm:$0xf]
  %v111 = vld [vmem:[%s1 + $0x14c] sm:$0xf]
  %v112 = vld [vmem:[%s1 + $0x150] sm:$0xf]
  %v113 = vld [vmem:[%s1 + $0x154] sm:$0xf]
  %v114 = vld [vmem:[%s1 + $0x158] sm:$0xf]
  %v115 = vld [vmem:[%s1 + $0x15c] sm:$0xf]
  %v116 = vld [vmem:[%s1 + $0x160] sm:$0xf]
  %v117 = vld [vmem:[%s1 + $0x164] sm:$0xf]
  %v118 = vld [vmem:[%s1 + $0x168] sm:$0xf]
  %v119 = vld [vmem:[%s1 + $0x16c] sm:$0xf]
  %v120 = vld [vmem:[%s1 + $0x170] sm:$0xf]
  %v121 = vld [vmem:[%s1 + $0x174] sm:$0xf]
  %v122 = vld [vmem:[%s1 + $0x178] sm:$0xf]
  %v123 = vld [vmem:[%s1 + $0x17c] sm:$0xf]
  %v124 = vld [vmem:[%s1 + $0x180] sm:$0xf]
  %v125 = vld [vmem:[%s1 + $0x184] sm:$0xf]
  %v126 = vld [vmem:[%s1 + $0x188] sm:$0xf]
  %v127 = vld [vmem:[%s1 + $0x18c] sm:$0xf]
  %v128 = vld [vmem:[%s1 + $0x190] sm:$0xf]
  %v129 = vld [vmem:[%s1 + $0x194] sm:$0xf]
  %v130 = vld [vmem:[%s1 + $0x198] sm:$0xf]
  %v131 = vld [vmem:[%s1 + $0x19c] sm:$0xf]
  %v132 = vld [vmem:[%s1 + $0x1a0] sm:$0xf]
  %v133 = vld [vmem:[%s1 + $0x1a4] sm:$0xf]
  %v134 = vld [vmem:[%s1 + $0x1a8] sm:$0xf]
  %v135 = vld [vmem:[%s1 + $0x1ac] sm:$0xf]
  %v136 = vld [vmem:[%s1 + $0x1b0] sm:$0xf]
  %v137 = vld [vmem:[%s1 + $0x1b4] sm:$0xf]
  %v138 = vld [vmem:[%s1 + $0x1b8] sm:$0xf]
  %v139 = vld [vmem:[%s1 + $0x1bc] sm:$0xf]
  %v140 = vld [vmem:[%s1 + $0x1c0] sm:$0xf]
  %v141 = vld [vmem:[%s1 + $0x1c4] sm:$0xf]
  %v142 = vld [vmem:[%s1 + $0x1c8] sm:$0xf]
  %v143 = vld [vmem:[%s1 + $0x1cc] sm:$0xf]
  %v144 = vld [vmem:[%s1 + $0x1d0] sm:$0xf]
  %v145 = vld [vmem:[%s1 + $0x1d4] sm:$0xf]
  %v146 = vld [vmem:[%s1 + $0x1d8] sm:$0xf]
  %v147 = vld [vmem:[%s1 + $0x1dc] sm:$0xf]
  %v148 = vld [vmem:[%s1 + $0x1e0] sm:$0xf]
  %v149 = vld [vmem:[%s1 + $0x1e4] sm:$0xf]
  %v150 = vld [vmem:[%s1 + $0x1e8] sm:$0xf]
  %v151 = vld [vmem:[%s1 + $0x1ec] sm:$0xf]
  %v152 = vld [vmem:[%s1 + $0x1f0] sm:$0xf]
  %v153 = vld [vmem:[%s1 + $0x1f4] sm:$0xf]
  %v154 = vld [vmem:[%s1 + $0x1f8] sm:$0xf]
  %v155 = vld [vmem:[%s1 + $0x1fc] sm:$0xf]
  %v164 = vunpack.c.l.b16 %v20
  %v165 = vunpack.c.h.b16 %v20
  %v166 = vunpack.c.l.b16 %v21
  %v167 = vunpack.c.h.b16 %v21
  %v168 = vunpack.c.l.b16 %v22
  %v169 = vunpack.c.h.b16 %v22
  %v170 = vunpack.c.l.b16 %v23
  %v171 = vunpack.c.h.b16 %v23
  %v172 = vunpack.c.l.b16 %v24
  %v173 = vunpack.c.h.b16 %v24
  %v174 = vunpack.c.l.b16 %v25
  %v175 = vunpack.c.h.b16 %v25
  %v176 = vunpack.c.l.b16 %v26
  %v177 = vunpack.c.h.b16 %v26
  %v178 = vunpack.c.l.b16 %v27
  %v179 = vunpack.c.h.b16 %v27
  %v180 = vpack.c.b16 %v172, %v164
  %v181 = vpack.c.b16 %v173, %v165
  %v182 = vpack.c.b16 %v174, %v166
  %v183 = vpack.c.b16 %v175, %v167
  %v184 = vpack.c.b16 %v176, %v168
  %v185 = vpack.c.b16 %v177, %v169
  %v186 = vpack.c.b16 %v178, %v170
  %v187 = vpack.c.b16 %v179, %v171
  %v324 = vunpack.c.l.b16 %v28
  %v325 = vunpack.c.l.b16 %v29
  %v326 = vunpack.c.l.b16 %v30
  %v327 = vunpack.c.l.b16 %v31
  %v328 = vunpack.c.l.b16 %v32
  %v329 = vunpack.c.l.b16 %v33
  %v330 = vunpack.c.l.b16 %v34
  %v331 = vunpack.c.l.b16 %v35
  %v332 = vunpack.c.l.b16 %v36
  %v333 = vunpack.c.l.b16 %v37
  %v334 = vunpack.c.l.b16 %v38
  %v335 = vunpack.c.l.b16 %v39
  %v336 = vunpack.c.l.b16 %v40
  %v337 = vunpack.c.l.b16 %v41
  %v338 = vunpack.c.l.b16 %v42
  %v339 = vunpack.c.l.b16 %v43
  %v340 = vunpack.c.l.b16 %v44
  %v341 = vunpack.c.l.b16 %v45
  %v342 = vunpack.c.l.b16 %v46
  %v343 = vunpack.c.l.b16 %v47
  %v344 = vunpack.c.l.b16 %v48
  %v345 = vunpack.c.l.b16 %v49
  %v346 = vunpack.c.l.b16 %v50
  %v347 = vunpack.c.l.b16 %v51
  %v348 = vunpack.c.l.b16 %v52
  %v349 = vunpack.c.l.b16 %v53
  %v350 = vunpack.c.l.b16 %v54
  %v351 = vunpack.c.l.b16 %v55
  %v352 = vunpack.c.l.b16 %v56
  %v353 = vunpack.c.l.b16 %v57
  %v354 = vunpack.c.l.b16 %v58
  %v355 = vunpack.c.l.b16 %v59
  %v356 = vunpack.c.l.b16 %v60
  %v357 = vunpack.c.l.b16 %v61
  %v358 = vunpack.c.l.b16 %v62
  %v359 = vunpack.c.l.b16 %v63
  %v360 = vunpack.c.l.b16 %v64
  %v361 = vunpack.c.l.b16 %v65
  %v362 = vunpack.c.l.b16 %v66
  %v363 = vunpack.c.l.b16 %v67
  %v364 = vunpack.c.l.b16 %v68
  %v365 = vunpack.c.l.b16 %v69
  %v366 = vunpack.c.l.b16 %v70
  %v367 = vunpack.c.l.b16 %v71
  %v368 = vunpack.c.l.b16 %v72
  %v369 = vunpack.c.l.b16 %v73
  %v370 = vunpack.c.l.b16 %v74
  %v371 = vunpack.c.l.b16 %v75
  %v372 = vunpack.c.l.b16 %v76
  %v373 = vunpack.c.l.b16 %v77
  %v374 = vunpack.c.l.b16 %v78
  %v375 = vunpack.c.l.b16 %v79
  %v376 = vunpack.c.l.b16 %v80
  %v377 = vunpack.c.l.b16 %v81
  %v378 = vunpack.c.l.b16 %v82
  %v379 = vunpack.c.l.b16 %v83
  %v380 = vunpack.c.l.b16 %v84
  %v381 = vunpack.c.l.b16 %v85
  %v382 = vunpack.c.l.b16 %v86
  %v383 = vunpack.c.l.b16 %v87
  %v384 = vunpack.c.l.b16 %v88
  %v385 = vunpack.c.l.b16 %v89
  %v386 = vunpack.c.l.b16 %v90
  %v387 = vunpack.c.l.b16 %v91
  %v388 = vunpack.c.l.b16 %v92
  %v389 = vunpack.c.l.b16 %v93
  %v390 = vunpack.c.l.b16 %v94
  %v391 = vunpack.c.l.b16 %v95
  %v392 = vunpack.c.l.b16 %v96
  %v393 = vunpack.c.l.b16 %v97
  %v394 = vunpack.c.l.b16 %v98
  %v395 = vunpack.c.l.b16 %v99
  %v396 = vunpack.c.l.b16 %v100
  %v397 = vunpack.c.l.b16 %v101
  %v398 = vunpack.c.l.b16 %v102
  %v399 = vunpack.c.l.b16 %v103
  %v400 = vunpack.c.l.b16 %v104
  %v401 = vunpack.c.l.b16 %v105
  %v402 = vunpack.c.l.b16 %v106
  %v403 = vunpack.c.l.b16 %v107
  %v404 = vunpack.c.l.b16 %v108
  %v405 = vunpack.c.l.b16 %v109
  %v406 = vunpack.c.l.b16 %v110
  %v407 = vunpack.c.l.b16 %v111
  %v408 = vunpack.c.l.b16 %v112
  %v409 = vunpack.c.l.b16 %v113
  %v410 = vunpack.c.l.b16 %v114
  %v411 = vunpack.c.l.b16 %v115
  %v412 = vunpack.c.l.b16 %v116
  %v413 = vunpack.c.l.b16 %v117
  %v414 = vunpack.c.l.b16 %v118
  %v415 = vunpack.c.l.b16 %v119
  %v416 = vunpack.c.l.b16 %v120
  %v417 = vunpack.c.l.b16 %v121
  %v418 = vunpack.c.l.b16 %v122
  %v419 = vunpack.c.l.b16 %v123
  %v420 = vunpack.c.l.b16 %v124
  %v421 = vunpack.c.l.b16 %v125
  %v422 = vunpack.c.l.b16 %v126
  %v423 = vunpack.c.l.b16 %v127
  %v424 = vunpack.c.l.b16 %v128
  %v425 = vunpack.c.l.b16 %v129
  %v426 = vunpack.c.l.b16 %v130
  %v427 = vunpack.c.l.b16 %v131
  %v428 = vunpack.c.l.b16 %v132
  %v429 = vunpack.c.l.b16 %v133
  %v430 = vunpack.c.l.b16 %v134
  %v431 = vunpack.c.l.b16 %v135
  %v432 = vunpack.c.l.b16 %v136
  %v433 = vunpack.c.l.b16 %v137
  %v434 = vunpack.c.l.b16 %v138
  %v435 = vunpack.c.l.b16 %v139
  %v436 = vunpack.c.l.b16 %v140
  %v437 = vunpack.c.l.b16 %v141
  %v438 = vunpack.c.l.b16 %v142
  %v439 = vunpack.c.l.b16 %v143
  %v440 = vunpack.c.l.b16 %v144
  %v441 = vunpack.c.l.b16 %v145
  %v442 = vunpack.c.l.b16 %v146
  %v443 = vunpack.c.l.b16 %v147
  %v444 = vunpack.c.l.b16 %v148
  %v445 = vunpack.c.l.b16 %v149
  %v446 = vunpack.c.l.b16 %v150
  %v447 = vunpack.c.l.b16 %v151
  %v448 = vunpack.c.l.b16 %v152
  %v449 = vunpack.c.l.b16 %v153
  %v450 = vunpack.c.l.b16 %v154
  %v451 = vunpack.c.l.b16 %v155
  %v452 = vpack.c.b16 %v325, %v324
  %v453 = vpack.c.b16 %v327, %v326
  %v454 = vpack.c.b16 %v329, %v328
  %v455 = vpack.c.b16 %v331, %v330
  %v456 = vpack.c.b16 %v333, %v332
  %v457 = vpack.c.b16 %v335, %v334
  %v458 = vpack.c.b16 %v337, %v336
  %v459 = vpack.c.b16 %v339, %v338
  %v460 = vpack.c.b16 %v341, %v340
  %v461 = vpack.c.b16 %v343, %v342
  %v462 = vpack.c.b16 %v345, %v344
  %v463 = vpack.c.b16 %v347, %v346
  %v464 = vpack.c.b16 %v349, %v348
  %v465 = vpack.c.b16 %v351, %v350
  %v466 = vpack.c.b16 %v353, %v352
  %v467 = vpack.c.b16 %v355, %v354
  %v468 = vpack.c.b16 %v357, %v356
  %v469 = vpack.c.b16 %v359, %v358
  %v470 = vpack.c.b16 %v361, %v360
  %v471 = vpack.c.b16 %v363, %v362
  %v472 = vpack.c.b16 %v365, %v364
  %v473 = vpack.c.b16 %v367, %v366
  %v474 = vpack.c.b16 %v369, %v368
  %v475 = vpack.c.b16 %v371, %v370
  %v476 = vpack.c.b16 %v373, %v372
  %v477 = vpack.c.b16 %v375, %v374
  %v478 = vpack.c.b16 %v377, %v376
  %v479 = vpack.c.b16 %v379, %v378
  %v480 = vpack.c.b16 %v381, %v380
  %v481 = vpack.c.b16 %v383, %v382
  %v482 = vpack.c.b16 %v385, %v384
  %v483 = vpack.c.b16 %v387, %v386
  %v484 = vpack.c.b16 %v389, %v388
  %v485 = vpack.c.b16 %v391, %v390
  %v486 = vpack.c.b16 %v393, %v392
  %v487 = vpack.c.b16 %v395, %v394
  %v488 = vpack.c.b16 %v397, %v396
  %v489 = vpack.c.b16 %v399, %v398
  %v490 = vpack.c.b16 %v401, %v400
  %v491 = vpack.c.b16 %v403, %v402
  %v492 = vpack.c.b16 %v405, %v404
  %v493 = vpack.c.b16 %v407, %v406
  %v494 = vpack.c.b16 %v409, %v408
  %v495 = vpack.c.b16 %v411, %v410
  %v496 = vpack.c.b16 %v413, %v412
  %v497 = vpack.c.b16 %v415, %v414
  %v498 = vpack.c.b16 %v417, %v416
  %v499 = vpack.c.b16 %v419, %v418
  %v500 = vpack.c.b16 %v421, %v420
  %v501 = vpack.c.b16 %v423, %v422
  %v502 = vpack.c.b16 %v425, %v424
  %v503 = vpack.c.b16 %v427, %v426
  %v504 = vpack.c.b16 %v429, %v428
  %v505 = vpack.c.b16 %v431, %v430
  %v506 = vpack.c.b16 %v433, %v432
  %v507 = vpack.c.b16 %v435, %v434
  %v508 = vpack.c.b16 %v437, %v436
  %v509 = vpack.c.b16 %v439, %v438
  %v510 = vpack.c.b16 %v441, %v440
  %v511 = vpack.c.b16 %v443, %v442
  %v512 = vpack.c.b16 %v445, %v444
  %v513 = vpack.c.b16 %v447, %v446
  %v514 = vpack.c.b16 %v449, %v448
  %v515 = vpack.c.b16 %v451, %v450
  %580 = vmatprep.subr.bf16.mxu0 0
  %581 = vmatpush1.bf16.msra.mxu0 %v452
  %582 = vmatprep.subr.bf16.mxu0 0
  %583 = vmatpush1.bf16.msra.mxu0 %v453
  %584 = vmatprep.subr.bf16.mxu0 0
  %585 = vmatpush1.bf16.msra.mxu0 %v454
  %586 = vmatprep.subr.bf16.mxu0 0
  %587 = vmatpush1.bf16.msra.mxu0 %v455
  %588 = vmatprep.subr.bf16.mxu0 0
  %589 = vmatpush1.bf16.msra.mxu0 %v456
  %590 = vmatprep.subr.bf16.mxu0 0
  %591 = vmatpush1.bf16.msra.mxu0 %v457
  %592 = vmatprep.subr.bf16.mxu0 0
  %593 = vmatpush1.bf16.msra.mxu0 %v458
  %594 = vmatprep.subr.bf16.mxu0 0
  %595 = vmatpush1.bf16.msra.mxu0 %v459
  %596 = vmatprep.subr.bf16.mxu0 0
  %597 = vmatpush1.bf16.msra.mxu0 %v460
  %598 = vmatprep.subr.bf16.mxu0 0
  %599 = vmatpush1.bf16.msra.mxu0 %v461
  %600 = vmatprep.subr.bf16.mxu0 0
  %601 = vmatpush1.bf16.msra.mxu0 %v462
  %602 = vmatprep.subr.bf16.mxu0 0
  %603 = vmatpush1.bf16.msra.mxu0 %v463
  %604 = vmatprep.subr.bf16.mxu0 0
  %605 = vmatpush1.bf16.msra.mxu0 %v464
  %606 = vmatprep.subr.bf16.mxu0 0
  %607 = vmatpush1.bf16.msra.mxu0 %v465
  %608 = vmatprep.subr.bf16.mxu0 0
  %609 = vmatpush1.bf16.msra.mxu0 %v466
  %610 = vmatprep.subr.bf16.mxu0 0
  %611 = vmatpush1.bf16.msra.mxu0 %v467
  %612 = vmatprep.mubr.bf16.mxu0 %v181
  %613 = vmatmul.mubr.bf16.gmra.mrb[0].mxu0 %v180
  %v614 = vpop.f32.mrb[0].mxu0
  %v615 = vadd.f32 0.0, %v614
  %v616 = vpop.f32.mrb[0].mxu0
  %v617 = vpop.f32.mrb[0].mxu0
  %v618 = vadd.f32 0.0, %v617
  %v619 = vpop.f32.mrb[0].mxu0
  %620 = vdwg.mxu0
  %621 = vmatprep.subr.bf16.mxu0 0
  %622 = vmatpush1.bf16.msra.mxu0 %v468
  %623 = vmatprep.subr.bf16.mxu0 0
  %624 = vmatpush1.bf16.msra.mxu0 %v469
  %625 = vmatprep.subr.bf16.mxu0 0
  %626 = vmatpush1.bf16.msra.mxu0 %v470
  %627 = vmatprep.subr.bf16.mxu0 0
  %628 = vmatpush1.bf16.msra.mxu0 %v471
  %629 = vmatprep.subr.bf16.mxu0 0
  %630 = vmatpush1.bf16.msra.mxu0 %v472
  %631 = vmatprep.subr.bf16.mxu0 0
  %632 = vmatpush1.bf16.msra.mxu0 %v473
  %633 = vmatprep.subr.bf16.mxu0 0
  %634 = vmatpush1.bf16.msra.mxu0 %v474
  %635 = vmatprep.subr.bf16.mxu0 0
  %636 = vmatpush1.bf16.msra.mxu0 %v475
  %637 = vmatprep.subr.bf16.mxu0 0
  %638 = vmatpush1.bf16.msra.mxu0 %v476
  %639 = vmatprep.subr.bf16.mxu0 0
  %640 = vmatpush1.bf16.msra.mxu0 %v477
  %641 = vmatprep.subr.bf16.mxu0 0
  %642 = vmatpush1.bf16.msra.mxu0 %v478
  %643 = vmatprep.subr.bf16.mxu0 0
  %644 = vmatpush1.bf16.msra.mxu0 %v479
  %645 = vmatprep.subr.bf16.mxu0 0
  %646 = vmatpush1.bf16.msra.mxu0 %v480
  %647 = vmatprep.subr.bf16.mxu0 0
  %648 = vmatpush1.bf16.msra.mxu0 %v481
  %649 = vmatprep.subr.bf16.mxu0 0
  %650 = vmatpush1.bf16.msra.mxu0 %v482
  %651 = vmatprep.subr.bf16.mxu0 0
  %652 = vmatpush1.bf16.msra.mxu0 %v483
  %653 = vmatprep.mubr.bf16.mxu0 %v183
  %654 = vmatmul.mubr.bf16.gmra.mrb[0].mxu0 %v182
  %v655 = vpop.f32.mrb[0].mxu0
  %v656 = vadd.f32 %v615, %v655
  %v657 = vpop.f32.mrb[0].mxu0
  %v658 = vpop.f32.mrb[0].mxu0
  %v659 = vadd.f32 %v618, %v658
  %v660 = vpop.f32.mrb[0].mxu0
  %661 = vdwg.mxu0
  %662 = vmatprep.subr.bf16.mxu0 0
  %663 = vmatpush1.bf16.msra.mxu0 %v484
  %664 = vmatprep.subr.bf16.mxu0 0
  %665 = vmatpush1.bf16.msra.mxu0 %v485
  %666 = vmatprep.subr.bf16.mxu0 0
  %667 = vmatpush1.bf16.msra.mxu0 %v486
  %668 = vmatprep.subr.bf16.mxu0 0
  %669 = vmatpush1.bf16.msra.mxu0 %v487
  %670 = vmatprep.subr.bf16.mxu0 0
  %671 = vmatpush1.bf16.msra.mxu0 %v488
  %672 = vmatprep.subr.bf16.mxu0 0
  %673 = vmatpush1.bf16.msra.mxu0 %v489
  %674 = vmatprep.subr.bf16.mxu0 0
  %675 = vmatpush1.bf16.msra.mxu0 %v490
  %676 = vmatprep.subr.bf16.mxu0 0
  %677 = vmatpush1.bf16.msra.mxu0 %v491
  %678 = vmatprep.subr.bf16.mxu0 0
  %679 = vmatpush1.bf16.msra.mxu0 %v492
  %680 = vmatprep.subr.bf16.mxu0 0
  %681 = vmatpush1.bf16.msra.mxu0 %v493
  %682 = vmatprep.subr.bf16.mxu0 0
  %683 = vmatpush1.bf16.msra.mxu0 %v494
  %684 = vmatprep.subr.bf16.mxu0 0
  %685 = vmatpush1.bf16.msra.mxu0 %v495
  %686 = vmatprep.subr.bf16.mxu0 0
  %687 = vmatpush1.bf16.msra.mxu0 %v496
  %688 = vmatprep.subr.bf16.mxu0 0
  %689 = vmatpush1.bf16.msra.mxu0 %v497
  %690 = vmatprep.subr.bf16.mxu0 0
  %691 = vmatpush1.bf16.msra.mxu0 %v498
  %692 = vmatprep.subr.bf16.mxu0 0
  %693 = vmatpush1.bf16.msra.mxu0 %v499
  %694 = vmatprep.mubr.bf16.mxu0 %v185
  %695 = vmatmul.mubr.bf16.gmra.mrb[0].mxu0 %v184
  %v696 = vpop.f32.mrb[0].mxu0
  %v697 = vadd.f32 %v656, %v696
  %v698 = vpop.f32.mrb[0].mxu0
  %v699 = vpop.f32.mrb[0].mxu0
  %v700 = vadd.f32 %v659, %v699
  %v701 = vpop.f32.mrb[0].mxu0
  %702 = vdwg.mxu0
  %703 = vmatprep.subr.bf16.mxu0 0
  %704 = vmatpush1.bf16.msra.mxu0 %v500
  %705 = vmatprep.subr.bf16.mxu0 0
  %706 = vmatpush1.bf16.msra.mxu0 %v501
  %707 = vmatprep.subr.bf16.mxu0 0
  %708 = vmatpush1.bf16.msra.mxu0 %v502
  %709 = vmatprep.subr.bf16.mxu0 0
  %710 = vmatpush1.bf16.msra.mxu0 %v503
  %711 = vmatprep.subr.bf16.mxu0 0
  %712 = vmatpush1.bf16.msra.mxu0 %v504
  %713 = vmatprep.subr.bf16.mxu0 0
  %714 = vmatpush1.bf16.msra.mxu0 %v505
  %715 = vmatprep.subr.bf16.mxu0 0
  %716 = vmatpush1.bf16.msra.mxu0 %v506
  %717 = vmatprep.subr.bf16.mxu0 0
  %718 = vmatpush1.bf16.msra.mxu0 %v507
  %719 = vmatprep.subr.bf16.mxu0 0
  %720 = vmatpush1.bf16.msra.mxu0 %v508
  %721 = vmatprep.subr.bf16.mxu0 0
  %722 = vmatpush1.bf16.msra.mxu0 %v509
  %723 = vmatprep.subr.bf16.mxu0 0
  %724 = vmatpush1.bf16.msra.mxu0 %v510
  %725 = vmatprep.subr.bf16.mxu0 0
  %726 = vmatpush1.bf16.msra.mxu0 %v511
  %727 = vmatprep.subr.bf16.mxu0 0
  %728 = vmatpush1.bf16.msra.mxu0 %v512
  %729 = vmatprep.subr.bf16.mxu0 0
  %730 = vmatpush1.bf16.msra.mxu0 %v513
  %731 = vmatprep.subr.bf16.mxu0 0
  %732 = vmatpush1.bf16.msra.mxu0 %v514
  %733 = vmatprep.subr.bf16.mxu0 0
  %734 = vmatpush1.bf16.msra.mxu0 %v515
  %735 = vmatprep.mubr.bf16.mxu0 %v187
  %736 = vmatmul.mubr.bf16.gmra.mrb[0].mxu0 %v186
  %v737 = vpop.f32.mrb[0].mxu0
  %v738 = vadd.f32 %v697, %v737
  %v739 = vpop.f32.mrb[0].mxu0
  %v740 = vpop.f32.mrb[0].mxu0
  %v741 = vadd.f32 %v700, %v740
  %v742 = vpop.f32.mrb[0].mxu0
  %743 = vdwg.mxu0
  %744 = vst [vmem:[%s2] sm:$0xff] %v738
  %745 = vst [vmem:[%s2 + $0x8] sm:$0xff] %v741
  // Predicated region
  $region10: #{head_forward.1} parent=0 // pred_check
    _
  $region11: #{head_forward.1} parent=0 // pred_check_branch
    %747 = sbr.rel (0) target = $region13
  $region12: #{head_forward.1} parent=0 // pred_region
    _
  $region13: #{head_forward.1} parent=0 // pred_fallthru
    _
  // Predicated region
  $region14: #{head_forward.1} parent=0 // pred_check
    _
  $region15: #{head_forward.1} parent=0 // pred_check_branch
    %749 = sbr.rel (0) target = $region17
  $region16: #{head_forward.1} parent=0 // pred_region
    _
  $region17: #{head_forward.1} parent=0 // pred_fallthru
    _

</llo_original>
